<compile_context>
chip_gen: v6e
topology: v6e:2x2x1
jax: 0.10.0
libtpu: 0.0.40
codegen_flags: <defaults>
</compile_context>

<pallas_src>
import math

import jax
import jax.numpy as jnp
from jax.experimental import pallas as pl
from jax.experimental.pallas import tpu as pltpu

# ---- problem sizes (small, consistent with the module) ----
B, S, D = 2, 8, 32        # batch, seq used in forward, d_model
SEQ_LEN = 16              # pe buffer length (constructor seq_len >= S)
DROPOUT = 0.0             # eval mode / p=0 -> dropout is identity

LANE = 128                # TPU lane width (last-dim tile)
TM_MAX = 1024             # max rows per block (512 KiB f32 tile)


def make_positional_encoding(seq_len: int, d_model: int) -> jnp.ndarray:
    """Builds the sinusoidal `pe` buffer exactly like the PyTorch __init__."""
    position = jnp.arange(seq_len, dtype=jnp.float32)[:, None]            # (L, 1)
    div_term = jnp.exp(jnp.arange(0, d_model, 2, dtype=jnp.float32)
                       * (-math.log(10000.0) / d_model))                  # (D/2,)
    pe = jnp.zeros((seq_len, d_model), jnp.float32)
    pe = pe.at[:, 0::2].set(jnp.sin(position * div_term))
    pe = pe.at[:, 1::2].set(jnp.cos(position * div_term))
    return pe                                                             # (L, D)


def pe_to_kernel_layout(pe: jnp.ndarray, b: int, s: int, d: int) -> jnp.ndarray:
    """Init-time: slice to seq len, broadcast over batch, flatten to (rows, 128).

    Done once when the module is constructed, NOT per forward call.
    """
    n = b * s * d
    assert n % LANE == 0, "toy/demo path assumes B*S*D divisible by 128"
    pe_b = jnp.broadcast_to(pe[:s, :][None, :, :], (b, s, d))
    return pe_b.reshape(n // LANE, LANE).astype(jnp.float32)


def pe_add_kernel(x_ref, pe_ref, o_ref):
    # Same-shape lane-dense add; pure VPU work hidden under the DMAs.
    o_ref[...] = x_ref[...] + pe_ref[...]
    # TODO(synk): train-mode dropout (p>0) would go here via pltpu.prng_seed +
    # pltpu.prng_random_bits mask + inverse-p scale; at p=0/eval it is identity.


def positional_encoding(x, pe_rows):
    """x: (B, S, D) f32; pe_rows: (B*S*D/128, 128) init-time kernel-layout buffer."""
    b, s, d = x.shape
    n = b * s * d
    assert n % LANE == 0, "toy/demo path assumes B*S*D divisible by 128"
    rows = n // LANE
    assert pe_rows.shape == (rows, LANE)

    # Row-major flatten: layout-neutral, keeps the last (lane) dim at 128.
    x2 = x.reshape(rows, LANE)

    # Largest tile that fits comfortably in every generation's scoped VMEM
    # (3 arrays x 2 pipeline buffers x TM*128*4B ≈ 3 MiB at TM=1024).
    tm = rows if rows <= TM_MAX else TM_MAX
    grid = (pl.cdiv(rows, tm),)

    out = pl.pallas_call(
        pe_add_kernel,
        out_shape=jax.ShapeDtypeStruct((rows, LANE), x.dtype),
        grid=grid,
        in_specs=[
            pl.BlockSpec((tm, LANE), lambda i: (i, 0)),   # x rows
            pl.BlockSpec((tm, LANE), lambda i: (i, 0)),   # pe rows (pre-tiled)
        ],
        out_specs=pl.BlockSpec((tm, LANE), lambda i: (i, 0)),
        # In-place: the PE add can safely overwrite x's buffer.
        input_output_aliases={0: 0},
        compiler_params=pltpu.CompilerParams(
            dimension_semantics=("parallel",),            # both TCs on v7x
        ),
    )(x2, pe_rows)

    return out.reshape(b, s, d)


def reference(x, pe):
    """Pure-JAX mirror of the PyTorch forward (eval mode)."""
    return x + pe[None, :x.shape[1], :]


if __name__ == "__main__":
    key = jax.random.PRNGKey(0)
    x = jax.random.normal(key, (B, S, D), jnp.float32)

    # "__init__": build pe and hoist it into kernel layout once.
    pe = make_positional_encoding(SEQ_LEN, D)
    pe_rows = pe_to_kernel_layout(pe, B, S, D)

    # Reference computed before the kernel call (the kernel aliases/donates
    # its flattened input buffer).
    ref = reference(x, pe)

    out = positional_encoding(x, pe_rows)
    out = jax.block_until_ready(out)

    assert out.shape == (B, S, D)
    assert jnp.allclose(out, ref, atol=1e-6, rtol=1e-6), (
        f"max abs err {jnp.max(jnp.abs(out - ref))}")
    print("KERNEL_OK")
</pallas_src>

<mosaic_0001>
module attributes {stable_mosaic.version = 11 : i64} {
  func.func @pe_add_kernel(%arg0: i32, %arg1: memref<4x128xf32, #tpu.memory_space<vmem>>, %arg2: memref<4x128xf32, #tpu.memory_space<vmem>>, %arg3: memref<4x128xf32, #tpu.memory_space<vmem>>) attributes {dimension_semantics = [#tpu.dimension_semantics<parallel>], iteration_bounds = array<i64: 1>, scalar_prefetch = 0 : i64, scratch_operands = 0 : i64, tpu.core_type = #tpu.core_type<tc>, window_params = [{transform_indices = @transform_0, window_bounds = array<i64: 4, 128>}, {transform_indices = @transform_1, window_bounds = array<i64: 4, 128>}, {transform_indices = @transform_2, window_bounds = array<i64: 4, 128>}]} {
    %c0 = arith.constant 0 : index
    %c0_0 = arith.constant 0 : index
    %0 = vector.load %arg1[%c0, %c0_0] : memref<4x128xf32, #tpu.memory_space<vmem>>, vector<4x128xf32>
    %c0_1 = arith.constant 0 : index
    %c0_2 = arith.constant 0 : index
    %1 = vector.load %arg2[%c0_1, %c0_2] : memref<4x128xf32, #tpu.memory_space<vmem>>, vector<4x128xf32>
    %2 = arith.addf %0, %1 : vector<4x128xf32>
    %c0_3 = arith.constant 0 : index
    %c0_4 = arith.constant 0 : index
    %3 = vector.load %arg3[%c0_3, %c0_4] : memref<4x128xf32, #tpu.memory_space<vmem>>, vector<4x128xf32>
    tpu.vector_store %arg3[%c0_3, %c0_4], %2 {strides = array<i32>} : memref<4x128xf32, #tpu.memory_space<vmem>>, vector<4x128xf32>,
    return
  }
  func.func @transform_0(%arg0: i32) -> (i32, i32) {
    %c0_i32 = arith.constant 0 : i32
    %c0_i32_0 = arith.constant 0 : i32
    return %arg0, %c0_i32 : i32, i32
  }
  func.func @transform_1(%arg0: i32) -> (i32, i32) {
    %c0_i32 = arith.constant 0 : i32
    %c0_i32_0 = arith.constant 0 : i32
    return %arg0, %c0_i32 : i32, i32
  }
  func.func @transform_2(%arg0: i32) -> (i32, i32) {
    %c0_i32 = arith.constant 0 : i32
    %c0_i32_0 = arith.constant 0 : i32
    return %arg0, %c0_i32 : i32, i32
  }
}

</mosaic_0001>

<llo_original>
// kernel: tpu_custom_call.1
$region0: #{tpu_custom_call.1}
  #allocation0 [shape = 'u32[]', space=smem, size = 0x4, offset = 0x4, fixed_abs, tag = 'smem constant byte address 0x4 - core index']
  #allocation1 [shape = 'u32[144,128]{1,0:T(1,128)}', space=vmem, size = 0x12000, scoped, tag = 'internal scratch']
  %s0 = inlined_call_operand.hbm [shape: f32[4,128], index: 0, kind: input, shape index: {}, may-alias: {0,2}]
  %s1 = inlined_call_operand.vmem [shape: f32[4,128], index: 1, kind: input, shape index: {}]
  %s2 = inlined_call_operand.hbm [shape: f32[4,128], index: 2, kind: output, shape index: {}, may-alias: {0,2}]
  %s3 = sld [smem:[#allocation0]]
  $region22: #{tpu_custom_call.1} parent=0
    _
  %s5 = ssub.s32 1, %s3
  %s6 = scalar_select 0, %s5, %s3
  $region1: #{tpu_custom_call.1} parent=0
    #allocation2 [shape = 'u8[2048]{0}', space=vmem, size = 0x800, scoped, tag = 'input window, operand 0, single buffered']
    #allocation3 [shape = 's32[1]{0}', space=sflag, size = 0x4, scoped, tag = 'scoped memory for tpu_custom_call.1']
    #allocation4 [shape = 's32[1]{0}', space=sflag, size = 0x4, scoped, tag = 'scoped memory for tpu_custom_call.1']
    #allocation5 [shape = 'u8[2048]{0}', space=vmem, size = 0x800, scoped, tag = 'output window, operand 0, single buffered']
    %7 = vsyncpa [#allocation3], 0
    %8 = vsyncpa [#allocation4], 0
    // Predicated region
    $region2: #{tpu_custom_call.1} parent=1 // pred_check
      _
    $region3: #{tpu_custom_call.1} parent=1 // pred_check_branch
      %10 = sbr.rel (0) target = $region5
    $region4: #{tpu_custom_call.1} parent=1 // pred_region
      %s12 = ssub.s32 64, 64
      %13 = vsyncadd [#allocation3], %s12
      %s15 = sshll.u32 [#allocation2], 4
      %s16 = int_to_ptr.vmem [resolvable:$true] %s15
      %18 = dma.hbm_to_vmem [thread:$0]  %s0, 64, %s16, [#allocation3]
    $region5: #{tpu_custom_call.1} parent=1 // pred_fallthru
      _
    // Predicated region
    $region6: #{tpu_custom_call.1} parent=1 // pred_check
      _
    $region7: #{tpu_custom_call.1} parent=1 // pred_check_branch
      %20 = sbr.rel (0) target = $region9
    $region8: #{tpu_custom_call.1} parent=1 // pred_region
      _
    $region9: #{tpu_custom_call.1} parent=1 // pred_fallthru
      _
    // Predicated region
    $region10: #{tpu_custom_call.1} parent=1 // pred_check
      _
    $region11: #{tpu_custom_call.1} parent=1 // pred_check_branch
      %22 = sbr.rel (0) target = $region13
    $region12: #{tpu_custom_call.1} parent=1 // pred_region
      %23 = dma.done [#allocation3], 64
    $region13: #{tpu_custom_call.1} parent=1 // pred_fallthru
      _
    %v24 = vld [vmem:[#allocation2] sm:$0xf]
    %v25 = vld [vmem:[%s1] sm:$0xf]
    %v26 = vadd.f32 %v24, %v25
    %27 = vst [vmem:[#allocation5] sm:$0xf] %v26
    // Predicated region
    $region14: #{tpu_custom_call.1} parent=1 // pred_check
      _
    $region15: #{tpu_custom_call.1} parent=1 // pred_check_branch
      %29 = sbr.rel (0) target = $region17
    $region16: #{tpu_custom_call.1} parent=1 // pred_region
      %s31 = ssub.s32 64, 64
      %32 = vsyncadd [#allocation4], %s31
      %s34 = sshll.u32 [#allocation5], 4
      %s35 = int_to_ptr.vmem [resolvable:$true] %s34
      %37 = dma.vmem_to_hbm [thread:$0]  %s35, 64, %s2, [#allocation4]
    $region17: #{tpu_custom_call.1} parent=1 // pred_fallthru
      _
    // Predicated region
    $region18: #{tpu_custom_call.1} parent=1 // pred_check
      _
    $region19: #{tpu_custom_call.1} parent=1 // pred_check_branch
      %39 = sbr.rel (0) target = $region21
    $region20: #{tpu_custom_call.1} parent=1 // pred_region
      %40 = dma.done [#allocation4], 64
    $region21: #{tpu_custom_call.1} parent=1 // pred_fallthru
      _
    %41 = vsyncpa [#allocation3], 1
    %42 = vsyncpa [#allocation4], 1

</llo_original>
